<compile_context>
chip_gen: v7x
topology: tpu7x:2x2x1
jax: 0.10.0
libtpu: 0.0.40
codegen_flags: <defaults>
</compile_context>

<pallas_src>
import functools

import jax
import jax.numpy as jnp
from jax.experimental import pallas as pl
from jax.experimental.pallas import tpu as pltpu


# --------------------------------------------------------------------------- kernel
def _lora_kernel(tm, scale_ref, w_ref, a_ref, b_ref, o_ref):
    # scale_ref: SMEM scalar; w/b/o: VMEM tiles; a_ref: full (M, r), resident in VMEM.
    i = pl.program_id(1)                        # M-tile index (inner grid axis)
    row0 = pl.multiple_of(i * tm, tm)
    a_tile = a_ref[pl.ds(row0, tm), :]
    # Fold the scalar into the thin (tm, r) A tile — far cheaper than scaling the wide
    # (tm, tn) delta — and keep MXU operands in B's native dtype (f32 accumulate).
    a_scaled = (a_tile.astype(jnp.float32) * scale_ref[0]).astype(b_ref.dtype)
    delta = jnp.dot(a_scaled, b_ref[...], preferred_element_type=jnp.float32)
    o_ref[...] = (w_ref[...].astype(jnp.float32) + delta).astype(o_ref.dtype)


# ------------------------------------------------------------------ tile selection
def _vmem_capacity_bytes():
    try:
        info = pltpu.get_tpu_info()
        cap = getattr(info, "vmem_capacity_bytes", None)
        if cap:
            return int(cap)
    except Exception:
        pass
    return 64 * 1024 * 1024  # conservative (v7x-sized) fallback


def _pick_tile(extent, preferred, align):
    """Largest t <= preferred with extent % t == 0 and t % align == 0, else full extent."""
    if extent <= preferred:
        return extent
    t = (preferred // align) * align
    while t >= align:
        if extent % t == 0:
            return t
        t -= align
    return extent


def _select_tiles(M, N, w_itemsize):
    vmem_cap = _vmem_capacity_bytes()
    big_vmem = vmem_cap >= 96 * 1024 * 1024            # v5e / v6e (128 MiB) vs v7x (64 MiB)
    # Constant per-step byte volume regardless of dtype (bf16 gets 2x the rows).
    target_tile_bytes = (8 if big_vmem else 4) * 1024 * 1024
    sublane_min = max(8, 32 // w_itemsize)             # 8 rows for f32, 16 for bf16

    tn = _pick_tile(N, 4096, 128)                      # lane-dense output tiles
    preferred_tm = max(sublane_min, target_tile_bytes // (tn * w_itemsize))
    tm = _pick_tile(M, preferred_tm, sublane_min)

    # v7x megacore: guarantee >= 2 grid blocks so both TensorCores get work.
    if (M // tm) * (N // tn) < 2:
        half_m, half_n = M // 2, N // 2
        if half_m >= sublane_min and half_m % sublane_min == 0 and M % max(half_m, 1) == 0:
            tm = half_m
        elif half_n >= 128 and half_n % 128 == 0 and N % max(half_n, 1) == 0:
            tn = half_n
    return tm, tn, vmem_cap


def _vmem_limit_bytes(tm, tn, M, r, w_itemsize, ab_itemsize, vmem_cap):
    tile_bytes = tm * tn * w_itemsize
    footprint = 2 * 2 * tile_bytes                     # double-buffered W in + O out
    footprint += 2 * max(r, 8) * tn * ab_itemsize      # B tile (sublane-padded), 2 bufs
    footprint += 2 * M * max(r, 128) * ab_itemsize     # resident A (lane-padded), 2 bufs
    limit = max(32 * 1024 * 1024, footprint + 16 * 1024 * 1024)
    limit = min(limit, int(vmem_cap * 0.85))           # leave headroom for Mosaic scratch
    return max(limit, footprint + 4 * 1024 * 1024)     # never starve the chosen tiles


# ----------------------------------------------------------------------- entry point
@functools.partial(jax.jit, static_argnames=("tile_m", "tile_n"))
def lora_forward(weight, A, B, scale, *, tile_m=None, tile_n=None):
    """out = weight + (A @ B) * scale, computed in a Pallas TPU kernel."""
    M, N = weight.shape
    r = A.shape[1]
    assert A.shape == (M, r) and B.shape == (r, N)
    assert scale.shape == (1,)

    w_item = jnp.dtype(weight.dtype).itemsize
    ab_item = jnp.dtype(A.dtype).itemsize

    tm, tn, vmem_cap = _select_tiles(M, N, w_item)
    if tile_m is not None:
        tm = min(tile_m, M)
    if tile_n is not None:
        tn = min(tile_n, N)
    assert M % tm == 0, "feature_in must be divisible by the row tile"
    assert N % tn == 0, "feature_out must be divisible by the column tile"
    # TODO(synk): non-divisible M/N would need padding or a masked edge-tile path.

    vmem_limit = _vmem_limit_bytes(tm, tn, M, r, w_item, ab_item, vmem_cap)

    # N axis outer, M axis inner: consecutive inner steps reuse the same B block,
    # so B stays resident in VMEM across the whole M sweep for each column tile.
    grid = (N // tn, M // tm)

    return pl.pallas_call(
        functools.partial(_lora_kernel, tm),
        out_shape=jax.ShapeDtypeStruct((M, N), weight.dtype),
        grid=grid,
        in_specs=[
            # scalar scale -> SMEM, untiled
            pl.BlockSpec(memory_space=pltpu.SMEM),
            # weight: (tm, tn) tile at (i, j)
            pl.BlockSpec((tm, tn), lambda j, i: (i, j)),
            # A: fully resident (constant block index); kernel slices its row tile
            pl.BlockSpec((M, r), lambda j, i: (0, 0)),
            # B: depends only on the N axis -> resident across the M sweep
            pl.BlockSpec((r, tn), lambda j, i: (0, j)),
        ],
        out_specs=pl.BlockSpec((tm, tn), lambda j, i: (i, j)),
        compiler_params=pltpu.CompilerParams(
            dimension_semantics=("parallel", "parallel"),
            vmem_limit_bytes=vmem_limit,
        ),
    )(scale, weight, A, B)


# -------------------------------------------------------------------------- testing
def _reference(weight, A, B, scale):
    delta = jnp.dot(A.astype(jnp.float32), B.astype(jnp.float32)) * scale[0]
    return (weight.astype(jnp.float32) + delta).astype(weight.dtype)


if __name__ == "__main__":
    key = jax.random.PRNGKey(0)
    keys = jax.random.split(key, 9)

    # --- Small demo shapes consistent with the module:
    #     a Linear-like weight of (feature_in=32, feature_out=128), rank=4, alpha=1.
    feature_in, feature_out, rank, alpha = 32, 128, 4, 1
    weight = jax.random.normal(keys[0], (feature_in, feature_out), dtype=jnp.float32)
    # Module zero-inits A and B; use deterministic random values so the matmul path runs.
    A = jax.random.normal(keys[1], (feature_in, rank), dtype=jnp.float32) * 0.1
    B = jax.random.normal(keys[2], (rank, feature_out), dtype=jnp.float32) * 0.1
    scale = jnp.array([alpha / rank], dtype=jnp.float32)

    out = jax.block_until_ready(lora_forward(weight, A, B, scale))
    ref = _reference(weight, A, B, scale)
    assert out.shape == weight.shape and out.dtype == weight.dtype
    assert jnp.allclose(out, ref, atol=1e-5, rtol=1e-5), "mismatch vs. reference (small)"

    # --- Multi-tile f32 check: exercises the 2-D grid / resident-B / resident-A path.
    M2, N2, r2 = 512, 4096, 8
    weight2 = jax.random.normal(keys[3], (M2, N2), dtype=jnp.float32)
    A2 = jax.random.normal(keys[4], (M2, r2), dtype=jnp.float32) * 0.05
    B2 = jax.random.normal(keys[5], (r2, N2), dtype=jnp.float32) * 0.05
    scale2 = jnp.array([alpha / r2], dtype=jnp.float32)

    out2 = jax.block_until_ready(lora_forward(weight2, A2, B2, scale2))
    ref2 = _reference(weight2, A2, B2, scale2)
    assert jnp.allclose(out2, ref2, atol=1e-4, rtol=1e-4), "mismatch vs. reference (f32 tiled)"

    # --- bf16 check: native-dtype MXU operands, 16-row sublane tiles, f32 accumulate.
    M3, N3, r3 = 256, 4096, 8
    weight3 = jax.random.normal(keys[6], (M3, N3), dtype=jnp.float32).astype(jnp.bfloat16)
    A3 = (jax.random.normal(keys[7], (M3, r3), dtype=jnp.float32) * 0.05).astype(jnp.bfloat16)
    B3 = (jax.random.normal(keys[8], (r3, N3), dtype=jnp.float32) * 0.05).astype(jnp.bfloat16)
    scale3 = jnp.array([alpha / r3], dtype=jnp.float32)

    out3 = jax.block_until_ready(lora_forward(weight3, A3, B3, scale3))
    ref3 = _reference(weight3, A3, B3, scale3)
    assert out3.dtype == jnp.bfloat16
    assert jnp.allclose(out3.astype(jnp.float32), ref3.astype(jnp.float32),
                        atol=5e-2, rtol=5e-2), "mismatch vs. reference (bf16)"

    print("KERNEL_OK")
</pallas_src>

<mosaic_0001>
module attributes {stable_mosaic.version = 11 : i64} {
  func.func @_lora_kernel(%arg0: i32, %arg1: i32, %arg2: memref<1xf32, #tpu.memory_space<smem>>, %arg3: memref<16x128xf32, #tpu.memory_space<vmem>>, %arg4: memref<32x4xf32, #tpu.memory_space<vmem>>, %arg5: memref<4x128xf32, #tpu.memory_space<vmem>>, %arg6: memref<16x128xf32, #tpu.memory_space<vmem>>) attributes {dimension_semantics = [#tpu.dimension_semantics<parallel>, #tpu.dimension_semantics<parallel>], iteration_bounds = array<i64: 1, 2>, scalar_prefetch = 0 : i64, scratch_operands = 0 : i64, tpu.core_type = #tpu.core_type<tc>, window_params = [{transform_indices = @transform_0, window_bounds = array<i64: 1>}, {transform_indices = @transform_1, window_bounds = array<i64: 16, 128>}, {pipeline_mode = #tpu.pipeline_mode<synchronous>, transform_indices = @transform_2, window_bounds = array<i64: 32, 4>}, {transform_indices = @transform_3, window_bounds = array<i64: 4, 128>}, {transform_indices = @transform_4, window_bounds = array<i64: 16, 128>}]} {
    %c16_i32 = arith.constant 16 : i32
    %0 = arith.muli %arg1, %c16_i32 : i32
    %1 = tpu.assume_multiple %0, 16 : i32
    %2 = arith.index_cast %1 : i32 to index
    %c0 = arith.constant 0 : index
    %3 = vector.load %arg4[%2, %c0] : memref<32x4xf32, #tpu.memory_space<vmem>>, vector<16x4xf32>
    %c0_0 = arith.constant 0 : index
    %4 = memref.load %arg2[%c0_0] : memref<1xf32, #tpu.memory_space<smem>>
    %5 = vector.broadcast %4 : f32 to vector<16x4xf32>
    %6 = arith.mulf %3, %5 : vector<16x4xf32>
    %c0_1 = arith.constant 0 : index
    %c0_2 = arith.constant 0 : index
    %7 = vector.load %arg5[%c0_1, %c0_2] : memref<4x128xf32, #tpu.memory_space<vmem>>, vector<4x128xf32>
    %cst = arith.constant dense<0.000000e+00> : vector<16x128xf32>
    %8 = tpu.matmul %6, %7, %cst {dimension_numbers = #tpu.dot_dimension_numbers<[1], [0], [0], [1], [0, 0, 1, 1], [], []>} : vector<16x4xf32>, vector<4x128xf32>, vector<16x128xf32> -> vector<16x128xf32>
    %c0_3 = arith.constant 0 : index
    %c0_4 = arith.constant 0 : index
    %9 = vector.load %arg3[%c0_3, %c0_4] : memref<16x128xf32, #tpu.memory_space<vmem>>, vector<16x128xf32>
    %10 = arith.addf %9, %8 : vector<16x128xf32>
    %c0_5 = arith.constant 0 : index
    %c0_6 = arith.constant 0 : index
    %11 = vector.load %arg6[%c0_5, %c0_6] : memref<16x128xf32, #tpu.memory_space<vmem>>, vector<16x128xf32>
    tpu.vector_store %arg6[%c0_5, %c0_6], %10 {strides = array<i32>} : memref<16x128xf32, #tpu.memory_space<vmem>>, vector<16x128xf32>,
    return
  }
  func.func @transform_0(%arg0: i32, %arg1: i32) -> i32 {
    %c0_i32 = arith.constant 0 : i32
    %c0_i32_0 = arith.constant 0 : i32
    return %c0_i32 : i32
  }
  func.func @transform_1(%arg0: i32, %arg1: i32) -> (i32, i32) {
    %c0_i32 = arith.constant 0 : i32
    return %arg1, %arg0 : i32, i32
  }
  func.func @transform_2(%arg0: i32, %arg1: i32) -> (i32, i32) {
    %c0_i32 = arith.constant 0 : i32
    %c0_i32_0 = arith.constant 0 : i32
    %c0_i32_1 = arith.constant 0 : i32
    return %c0_i32, %c0_i32_0 : i32, i32
  }
  func.func @transform_3(%arg0: i32, %arg1: i32) -> (i32, i32) {
    %c0_i32 = arith.constant 0 : i32
    %c0_i32_0 = arith.constant 0 : i32
    return %c0_i32, %arg0 : i32, i32
  }
  func.func @transform_4(%arg0: i32, %arg1: i32) -> (i32, i32) {
    %c0_i32 = arith.constant 0 : i32
    return %arg1, %arg0 : i32, i32
  }
}

</mosaic_0001>

<llo_original>
// kernel: lora_forward.1
$region0: #{lora_forward.1}
  #allocation0 [shape = 'u32[]', space=smem, size = 0x4, offset = 0x4, fixed_abs, tag = 'smem constant byte address 0x4 - core index']
  #allocation1 [shape = 'u32[144,128]{1,0:T(1,128)}', space=vmem, size = 0x12000, scoped, tag = 'internal scratch']
  #allocation2 [shape = 'f32[1]{0:T(128)S(6)}', space=smem, size = 0x200, scoped, tag = 'scoped memory for lora_forward.1']
  %s0 = inlined_call_operand.<no memory space> [shape: f32[1], index: 0, kind: input, shape index: {}]
  %s1 = inlined_call_operand.vmem [shape: f32[32,128], index: 1, kind: input, shape index: {}]
  %s2 = inlined_call_operand.vmem [shape: f32[32,4], index: 2, kind: input, shape index: {}]
  %s3 = inlined_call_operand.vmem [shape: f32[4,128], index: 3, kind: input, shape index: {}]
  %s4 = inlined_call_operand.hbm [shape: f32[32,128], index: 4, kind: output, shape index: {}]
  %s5 = sld [smem:[#allocation0]]
  $region49: #{lora_forward.1} parent=0
    _
  %s7 = ssub.s32 1, %s5
  %s8 = scalar_select 0, %s7, %s5
  %9 = sst [smem:[#allocation2]] %s0
  $region1: #{lora_forward.1} parent=0
    #allocation3 [shape = 'u8[16384]{0}', space=vmem, size = 0x4000, scoped, tag = 'output window, operand 0']
    #allocation4 [shape = 's32[2]{0}', space=sflag, size = 0x8, scoped, tag = 'scoped memory for lora_forward.1']
    %10 = vsyncpa [#allocation4], 0
    %s11 = scalar_lea.sflag [#allocation4], 1
    %12 = vsyncpa %s11, 0
    loop: start=0, step=1, limit=4
    $region2: #{lora_forward.1} parent=1 // loop_pre_header
      _
    $region3: #{lora_forward.1} parent=1 // loop_header
      %s14 = sphi 0, %s18
      %p15 = scmp.ge.s32.totalorder %s14, 4
      %s21 = sphi 0, %s33
      %s22 = sphi 0, %s29
      %s23 = sphi 0, %s21
      %s24 = sphi 0, %s22
      %s25 = sphi 0, %s23
      %s26 = sphi 0, %s24
      %s34 = sphi 0, %s34
      %s36 = sphi 0, %s34
      %s37 = sphi 0, %s36
      %s51 = sphi 0, %s37
      %s59 = sphi 0, %s61
      %s62 = sphi 0, %s59
      %s63 = sphi 0, %s62
      %s79 = sphi 0, %s63
      %s83 = sphi 0, %s83
      %s85 = sphi 0, %s83
      %s86 = sphi 0, %s85
      %s100 = sphi 0, %s86
      %s106 = sphi 0, %s108
      %s109 = sphi 0, %s106
      %s110 = sphi 0, %s109
      %s126 = sphi 0, %s110
      %s134 = sphi 0, %s136
      %s137 = sphi 0, %s134
      %s138 = sphi 0, %s137
      %s154 = sphi 0, %s138
    $region4: #{lora_forward.1} parent=1 // loop_header_branch
      %17 = sbr.rel (%p15) target = $region8
    $region5: #{lora_forward.1} parent=1 // loop_body
      %s19 = ssub.s32 %s14, 1
      %s20 = ssub.s32 %s14, 2
      %s27 = sadd.s32 1, %s22
      %p28 = scmp.ge.s32.totalorder %s27, 2
      %s29 = scalar_select %p28, 0, %s27
      %s30 = sadd.s32 1, %s21
      %s31 = scalar_select %p28, %s30, %s21
      %p32 = scmp.ge.s32.totalorder %s31, 1
      %s33 = scalar_select %p32, 0, %s31
      %s35 = sadd.s32 %s34, 1
      %p38 = scmp.eq.s32.totalorder %s14, 1
      %p39 = scmp.ne.s32.totalorder %s34, %s36
      %p40 = scmp.eq.s32.totalorder %s14, 0
      %p41 = por %p39, %p40
      %p42 = scmp.ne.s32.totalorder %s34, %s36
      %p43 = scmp.eq.s32.totalorder %s19, 1
      %p44 = por %p42, %p43
      %p45 = scmp.ne.s32.totalorder %s36, %s37
      %p46 = scmp.eq.s32.totalorder %s19, 0
      %p47 = por %p45, %p46
      %p48 = scmp.ne.s32.totalorder %s36, %s37
      %p49 = scmp.eq.s32.totalorder %s20, 1
      %p50 = por %p48, %p49
      %p52 = scmp.ne.s32.totalorder %s37, %s51
      %p53 = scmp.eq.s32.totalorder %s20, 0
      %p54 = por %p52, %p53
      %s55 = ssub.s32 %s22, %s29
      %s56 = ssub.s32 %s21, %s33
      %s57 = sor.u32 %s55, %s56
      %p58 = scmp.eq.s32.totalorder %s57, 0
      %s60 = sadd.s32 %s59, 1
      %s61 = scalar_select %p58, %s59, %s60
      %p64 = pneg %p58
      %p65 = scmp.eq.s32.totalorder %s14, 1
      %p66 = por %p64, %p65
      %p67 = scmp.ne.s32.totalorder %s59, %s62
      %p68 = scmp.eq.s32.totalorder %s14, 0
      %p69 = por %p67, %p68
      %p70 = scmp.ne.s32.totalorder %s59, %s62
      %p71 = scmp.eq.s32.totalorder %s19, 1
      %p72 = por %p70, %p71
      %p73 = scmp.ne.s32.totalorder %s62, %s63
      %p74 = scmp.eq.s32.totalorder %s19, 0
      %p75 = por %p73, %p74
      %p76 = scmp.ne.s32.totalorder %s62, %s63
      %p77 = scmp.eq.s32.totalorder %s20, 1
      %p78 = por %p76, %p77
      %p80 = scmp.ne.s32.totalorder %s63, %s79
      %p81 = scmp.eq.s32.totalorder %s20, 0
      %p82 = por %p80, %p81
      %s84 = sadd.s32 %s83, 1
      %p87 = scmp.eq.s32.totalorder %s14, 1
      %p88 = scmp.ne.s32.totalorder %s83, %s85
      %p89 = scmp.eq.s32.totalorder %s14, 0
      %p90 = por %p88, %p89
      %p91 = scmp.ne.s32.totalorder %s83, %s85
      %p92 = scmp.eq.s32.totalorder %s19, 1
      %p93 = por %p91, %p92
      %p94 = scmp.ne.s32.totalorder %s85, %s86
      %p95 = scmp.eq.s32.totalorder %s19, 0
      %p96 = por %p94, %p95
      %p97 = scmp.ne.s32.totalorder %s85, %s86
      %p98 = scmp.eq.s32.totalorder %s20, 1
      %p99 = por %p97, %p98
      %p101 = scmp.ne.s32.totalorder %s86, %s100
      %p102 = scmp.eq.s32.totalorder %s20, 0
      %p103 = por %p101, %p102
      %s104 = ssub.s32 %s21, %s33
      %p105 = scmp.eq.s32.totalorder %s104, 0
      %s107 = sadd.s32 %s106, 1
      %s108 = scalar_select %p105, %s106, %s107
      %p111 = pneg %p105
      %p112 = scmp.eq.s32.totalorder %s14, 1
      %p113 = por %p111, %p112
      %p114 = scmp.ne.s32.totalorder %s106, %s109
      %p115 = scmp.eq.s32.totalorder %s14, 0
      %p116 = por %p114, %p115
      %p117 = scmp.ne.s32.totalorder %s106, %s109
      %p118 = scmp.eq.s32.totalorder %s19, 1
      %p119 = por %p117, %p118
      %p120 = scmp.ne.s32.totalorder %s109, %s110
      %p121 = scmp.eq.s32.totalorder %s19, 0
      %p122 = por %p120, %p121
      %p123 = scmp.ne.s32.totalorder %s109, %s110
      %p124 = scmp.eq.s32.totalorder %s20, 1
      %p125 = por %p123, %p124
      %p127 = scmp.ne.s32.totalorder %s110, %s126
      %p128 = scmp.eq.s32.totalorder %s20, 0
      %p129 = por %p127, %p128
      %s130 = ssub.s32 %s22, %s29
      %s131 = ssub.s32 %s21, %s33
      %s132 = sor.u32 %s130, %s131
      %p133 = scmp.eq.s32.totalorder %s132, 0
      %s135 = sadd.s32 %s134, 1
      %s136 = scalar_select %p133, %s134, %s135
      %p139 = pneg %p133
      %p140 = scmp.eq.s32.totalorder %s14, 1
      %p141 = por %p139, %p140
      %p142 = scmp.ne.s32.totalorder %s134, %s137
      %p143 = scmp.eq.s32.totalorder %s14, 0
      %p144 = por %p142, %p143
      %p145 = scmp.ne.s32.totalorder %s134, %s137
      %p146 = scmp.eq.s32.totalorder %s19, 1
      %p147 = por %p145, %p146
      %p148 = scmp.ne.s32.totalorder %s137, %s138
      %p149 = scmp.eq.s32.totalorder %s19, 0
      %p150 = por %p148, %p149
      %p151 = scmp.ne.s32.totalorder %s137, %s138
      %p152 = scmp.eq.s32.totalorder %s20, 1
      %p153 = por %p151, %p152
      %p155 = scmp.ne.s32.totalorder %s138, %s154
      %p156 = scmp.eq.s32.totalorder %s20, 0
      %p157 = por %p155, %p156
      %p158 = scmp.le.s32.totalorder 1, %s14
      %p159 = scmp.lt.s32.totalorder %s14, 3
      %p160 = pnand %p158, %p159
      %p161 = pneg %p160
      // Predicated region
      $region9: #{lora_forward.1} parent=5 // pred_check
        _
      $region10: #{lora_forward.1} parent=5 // pred_check_branch
        %163 = sbr.rel (%p160) target = $region12
      $region11: #{lora_forward.1} parent=5 // pred_region
        %s164 = ssub.s32 %s14, 1
        // Predicated region
        $region13: #{lora_forward.1} parent=11 // pred_check
          %p165 = pneg %p47
        $region14: #{lora_forward.1} parent=11 // pred_check_branch
          %167 = sbr.rel (%p165) target = $region16
        $region15: #{lora_forward.1} parent=11 // pred_region
          _
        $region16: #{lora_forward.1} parent=11 // pred_fallthru
          _
        // Predicated region
        $region17: #{lora_forward.1} parent=11 // pred_check
          %p168 = pneg %p96
        $region18: #{lora_forward.1} parent=11 // pred_check_branch
          %170 = sbr.rel (%p168) target = $region20
        $region19: #{lora_forward.1} parent=11 // pred_region
          _
        $region20: #{lora_forward.1} parent=11 // pred_fallthru
          _
        // Predicated region
        $region21: #{lora_forward.1} parent=11 // pred_check
          %p171 = pneg %p122
        $region22: #{lora_forward.1} parent=11 // pred_check_branch
          %173 = sbr.rel (%p171) target = $region24
        $region23: #{lora_forward.1} parent=11 // pred_region
          %p174 = scmp.lt.s32.totalorder %s23, 0
          %s175 = scalar_select %p174, %s23, 0
          %s176 = smul.addr %s175, 4
          %s177 = scalar_lea.vmem %s3, %s176
        $region24: #{lora_forward.1} parent=11 // pred_fallthru
          _
      $region12: #{lora_forward.1} parent=5 // pred_fallthru
        _
      %p178 = scmp.lt.s32.totalorder %s14, 2
      // Predicated region
      $region25: #{lora_forward.1} parent=5 // pred_check
        %p179 = pneg %p178
      $region26: #{lora_forward.1} parent=5 // pred_check_branch
        %181 = sbr.rel (%p179) target = $region28
      $region27: #{lora_forward.1} parent=5 // pred_region
        // Predicated region
        $region29: #{lora_forward.1} parent=27 // pred_check
          %p182 = pneg %p69
        $region30: #{lora_forward.1} parent=27 // pred_check_branch
          %184 = sbr.rel (%p182) target = $region32
        $region31: #{lora_forward.1} parent=27 // pred_region
          %s185 = smul.u32 2, %s22
          %p186 = scmp.lt.s32.totalorder %s185, 3
          %s187 = scalar_select %p186, %s185, 3
          %p188 = scmp.lt.s32.totalorder %s21, 0
          %s189 = scalar_select %p188, %s21, 0
          %s190 = sadd.s32 %s189, %s187
          %s191 = smul.addr %s190, 8
          %s192 = scalar_lea.vmem %s1, %s191
          %s193 = smul.u32 2, %s22
        $region32: #{lora_forward.1} parent=27 // pred_fallthru
          _
      $region28: #{lora_forward.1} parent=5 // pred_fallthru
        _
      %p194 = scmp.le.s32.totalorder 1, %s14
      %p195 = scmp.lt.s32.totalorder %s14, 3
      %p196 = pnand %p194, %p195
      %p197 = pneg %p196
      // Predicated region
      $region33: #{lora_forward.1} parent=5 // pred_check
        _
      $region34: #{lora_forward.1} parent=5 // pred_check_branch
        %199 = sbr.rel (%p196) target = $region36
      $region35: #{lora_forward.1} parent=5 // pred_region
        %s200 = ssub.s32 %s14, 1
        %p201 = pneg %p47
        %p202 = pneg %p44
        %s203 = smul.u32 2, %s24
        %p204 = scmp.lt.s32.totalorder %s203, 3
        %s205 = scalar_select %p204, %s203, 3
        %p206 = scmp.lt.s32.totalorder %s23, 0
        %s207 = scalar_select %p206, %s23, 0
        %s208 = sadd.s32 %s207, %s205
        %s209 = smul.addr %s208, 8
        %s210 = scalar_lea.vmem %s1, %s209
        %p211 = pneg %p75
        %p212 = pneg %p72
        %p213 = pneg %p96
        %p214 = pneg %p93
        %p215 = scmp.lt.s32.totalorder %s23, 0
        %s216 = scalar_select %p215, %s23, 0
        %s217 = smul.addr %s216, 4
        %s218 = scalar_lea.vmem %s3, %s217
        %p219 = pneg %p122
        %p220 = pneg %p119
        %p221 = pneg %p150
        %p222 = pneg %p147
        %s223 = sand.u32 %s137, 1
        %s224 = scalar_lea.sflag [#allocation4], %s223
        %s225 = sand.u32 %s137, 1
        %s226 = smul.addr %s225, 16
        %s227 = scalar_lea.vmem [#allocation3], %s226
        %s228 = smul.u32 2, %s24
        %p229 = scmp.lt.s32.totalorder %s228, 3
        %s230 = scalar_select %p229, %s228, 3
        %p231 = scmp.lt.s32.totalorder %s23, 0
        %s232 = scalar_select %p231, %s23, 0
        %s233 = sadd.s32 %s232, %s230
        %s234 = smul.addr %s233, 8
        %s235 = scalar_lea.vmem %s1, %s234
        %s236 = smul.u32 2, %s24
        %p237 = scmp.lt.s32.totalorder %s23, 0
        %s238 = scalar_select %p237, %s23, 0
        %s239 = smul.addr %s238, 4
        %s240 = scalar_lea.vmem %s3, %s239
        %s241 = smul.u32 2, %s24
        %s242 = smul.u32 %s24, 16
        %s243 = scalar_lea.vmem %s2, %s242
        %v244 = vld [vmem:[%s243] sm:$0xff]
        %v245 = vld [vmem:[%s243 + $0x8] sm:$0xff]
        %s246 = sld [smem:[#allocation2]]
        %v247 = vstv %s246
        %v248 = vmul.f32 %v244, %v247
        %v249 = vmul.f32 %v245, %v247
        %v250 = vld [vmem:[%s240] sm:$0xf]
        %vm251 = vcmask 31744
        %v253 = vsel %vm251, %v248, 0
        %v256 = vsel %vm251, %v249, 0
        %vm258 = vcmask 1043456
        %v260 = vsel %vm258, %v250, 0
        %262 = vmatprep.subr.mxu0 0.0
        %263 = vmatpush1.msra.mxu0 %v260
        %264 = vmatprep.subr.mxu0 0.0
        %265 = vmatpush1.msra.mxu0 0.0
        %266 = vmatprep.subr.mxu0 0.0
        %267 = vmatpush1.msra.mxu0 0.0
        %268 = vmatprep.subr.mxu0 0.0
        %269 = vmatpush1.msra.mxu0 0.0
        %270 = vmatprep.subr.mxu0 0.0
        %271 = vmatpush1.msra.mxu0 0.0
        %272 = vmatprep.subr.mxu0 0.0
        %273 = vmatpush1.msra.mxu0 0.0
        %274 = vmatprep.subr.mxu0 0.0
        %275 = vmatpush1.msra.mxu0 0.0
        %276 = vmatprep.subr.mxu0 0.0
        %277 = vmatpush1.msra.mxu0 0.0
        %278 = vmatprep.subr.mxu0 0.0
        %279 = vmatpush1.msra.mxu0 0.0
        %280 = vmatprep.subr.mxu0 0.0
        %281 = vmatpush1.msra.mxu0 0.0
        %282 = vmatprep.subr.mxu0 0.0
        %283 = vmatpush1.msra.mxu0 0.0
        %284 = vmatprep.subr.mxu0 0.0
        %285 = vmatpush1.msra.mxu0 0.0
        %286 = vmatprep.subr.mxu0 0.0
        %287 = vmatpush1.msra.mxu0 0.0
        %288 = vmatprep.subr.mxu0 0.0
        %289 = vmatpush1.msra.mxu0 0.0
        %290 = vmatprep.subr.mxu0 0.0
        %291 = vmatpush1.msra.mxu0 0.0
        %292 = vmatprep.subr.mxu0 0.0
        %293 = vmatpush1.msra.mxu0 0.0
        %294 = vmatprep.subr.mxu0 0.0
        %295 = vmatpush1.msra.mxu0 0.0
        %296 = vmatprep.subr.mxu0 0.0
        %297 = vmatpush1.msra.mxu0 0.0
        %298 = vmatprep.subr.mxu0 0.0
        %299 = vmatpush1.msra.mxu0 0.0
        %300 = vmatprep.subr.mxu0 0.0
        %301 = vmatpush1.msra.mxu0 0.0
        %302 = vmatprep.subr.mxu0 0.0
        %303 = vmatpush1.msra.mxu0 0.0
        %304 = vmatprep.subr.mxu0 0.0
        %305 = vmatpush1.msra.mxu0 0.0
        %306 = vmatprep.subr.mxu0 0.0
        %307 = vmatpush1.msra.mxu0 0.0
        %308 = vmatprep.subr.mxu0 0.0
        %309 = vmatpush1.msra.mxu0 0.0
        %310 = vmatprep.subr.mxu0 0.0
        %311 = vmatpush1.msra.mxu0 0.0
        %312 = vmatprep.subr.mxu0 0.0
        %313 = vmatpush1.msra.mxu0 0.0
        %314 = vmatprep.subr.mxu0 0.0
        %315 = vmatpush1.msra.mxu0 0.0
        %316 = vmatprep.subr.mxu0 0.0
        %317 = vmatpush1.msra.mxu0 0.0
        %318 = vmatprep.subr.mxu0 0.0
        %319 = vmatpush1.msra.mxu0 0.0
        %320 = vmatprep.subr.mxu0 0.0
        %321 = vmatpush1.msra.mxu0 0.0
        %322 = vmatprep.subr.mxu0 0.0
        %323 = vmatpush1.msra.mxu0 0.0
        %324 = vmatprep.subr.mxu0 0.0
        %325 = vmatpush1.msra.mxu0 0.0
        %326 = vmatprep.mubr.f32.mxu0 0.0
        %327 = vmatmul.mubr.f32.gmra.mrb[0].mxu0 %v253
        %v328 = vpop.f32.mrb[0].mxu0
        %v329 = vadd.f32 0.0, %v328
        %v330 = vpop.f32.mrb[0].mxu0
        %331 = vmatprep.mubr.f32.mxu0 0.0
        %332 = vmatmul.mubr.f32.gmra.mrb[0].mxu0 %v256
        %v333 = vpop.f32.mrb[0].mxu0
        %v334 = vadd.f32 0.0, %v333
        %v335 = vpop.f32.mrb[0].mxu0
        %336 = vdwg.mxu0
        %v337 = vld [vmem:[%s235] sm:$0xff]
        %v338 = vld [vmem:[%s235 + $0x8] sm:$0xff]
        %v339 = vadd.f32 %v337, %v329
        %v340 = vadd.f32 %v338, %v334
        %341 = vst [vmem:[%s227] sm:$0xff] %v339
        %342 = vst [vmem:[%s227 + $0x8] sm:$0xff] %v340
        %s343 = sand.u32 %s137, 1
        %s344 = scalar_lea.sflag [#allocation4], %s343
        %s345 = sand.u32 %s137, 1
        %s346 = smul.addr %s345, 16
        %s347 = scalar_lea.vmem [#allocation3], %s346
        // Predicated region
        $region37: #{lora_forward.1} parent=35 // pred_check
          %p348 = pneg %p147
        $region38: #{lora_forward.1} parent=35 // pred_check_branch
          %350 = sbr.rel (%p348) target = $region40
        $region39: #{lora_forward.1} parent=35 // pred_region
          %s351 = smul.u32 2, %s24
          %s353 = ssub.s32 256, 256
          %354 = vsyncadd %s344, %s353
          %s355 = sadd.s32 %s23, %s351
          %s356 = smul.addr %s355, 128
          %s357 = scalar_lea.hbm %s4, %s356
          %s358 = sshll.u32 %s347, 4
          %s359 = int_to_ptr.vmem [resolvable:$true] %s358
          %364 = dma.vmem_to_hbm [thread:$0]  %s359, 256, %s357, %s344, 128, 128, 8
        $region40: #{lora_forward.1} parent=35 // pred_fallthru
          _
      $region36: #{lora_forward.1} parent=5 // pred_fallthru
        _
      %p365 = scmp.le.s32.totalorder 2, %s14
      // Predicated region
      $region41: #{lora_forward.1} parent=5 // pred_check
        %p366 = pneg %p365
      $region42: #{lora_forward.1} parent=5 // pred_check_branch
        %368 = sbr.rel (%p366) target = $region44
      $region43: #{lora_forward.1} parent=5 // pred_region
        %s369 = ssub.s32 %s14, 2
        // Predicated region
        $region45: #{lora_forward.1} parent=43 // pred_check
          %p370 = pneg %p153
        $region46: #{lora_forward.1} parent=43 // pred_check_branch
          %372 = sbr.rel (%p370) target = $region48
        $region47: #{lora_forward.1} parent=43 // pred_region
          %s373 = sand.u32 %s138, 1
          %s374 = scalar_lea.sflag [#allocation4], %s373
          %s375 = sand.u32 %s138, 1
          %s376 = smul.addr %s375, 16
          %s377 = scalar_lea.vmem [#allocation3], %s376
          %378 = dma.done %s374, 256
        $region48: #{lora_forward.1} parent=43 // pred_fallthru
          _
      $region44: #{lora_forward.1} parent=5 // pred_fallthru
        _
    $region6: #{lora_forward.1} parent=1 // loop_footer
      %s18 = sadd.s32 1, %s14
    $region7: #{lora_forward.1} parent=1 // loop_footer_branch
      %13 = sbr.rel target = $region3
    $region8: #{lora_forward.1} parent=1 // loop_exit
      _
    %379 = vsyncpa [#allocation4], 1
    %s380 = scalar_lea.sflag [#allocation4], 1
    %381 = vsyncpa %s380, 1

</llo_original>
